<compile_context>
chip_gen: v5e
topology: v5e:2x2
jax: 0.10.0
libtpu: 0.0.40
codegen_flags: <defaults>
</compile_context>

<pallas_src>
import functools

import jax
import jax.numpy as jnp
from jax import lax
from jax.experimental import pallas as pl
from jax.experimental.pallas import tpu as pltpu


LEAKY_SLOPE = 0.01   # torch.nn.functional.leaky_relu default
BN_EPS = 1e-5        # nn.BatchNorm1d default

_VMEM = pl.BlockSpec(memory_space=pltpu.MemorySpace.VMEM)
_VMEM_LIMIT = 32 * 1024 * 1024          # safe on v5e/v6e/v7x scoped budgets

_FUSED_MAX_B = 256                      # single-shot path up to this batch
_TILE_CANDIDATES = (256, 512, 128, 64, 32, 16, 8)   # preferred batch tiles


def _round_up(n, m):
    return ((n + m - 1) // m) * m


def _leaky_relu(y):
    # max(y, slope*y) == leaky_relu(y) for 0 < slope < 1 (one VPU op cheaper
    # than cmp+select).
    return jnp.maximum(y, LEAKY_SLOPE * y)


def _bn_lrelu_from_stats(h, s, ss, gamma, beta, inv_b):
    """Train-mode BatchNorm (folded affine) + leaky ReLU from sum / sum-sq.

    h: [B, F] f32 ; s, ss, gamma, beta: [1, F] f32 ; inv_b: python float 1/B_total.
    """
    mean = s * inv_b
    var = jnp.maximum(ss * inv_b - mean * mean, 0.0)   # biased var, clamp cancellation
    inv = lax.rsqrt(var + BN_EPS)
    scale = gamma * inv                                 # [1, F] ops (cheap)
    shift = beta - mean * scale
    y = h * scale + shift                               # 2 full-[B,F] VPU ops
    return _leaky_relu(y)


# ---------------------------------------------------------------------------
# Fused single-shot kernel (whole batch resident in VMEM).
# ---------------------------------------------------------------------------
def _actor_fused_kernel(x_ref, w_ref, vec_ref, out_ref, *,
                        in_dim, in_p, h0p, h1p, out_p):
    # w_ref rows: [0,in_p)=w1, [in_p,in_p+h0p)=w2, [in_p+h0p,in_p+h0p+h1p)=w3.
    # vec_ref rows: 0=g1, 1=be1, 2=g2, 3=be2, 4=b3 (all zero-padded on lanes).
    inv_b = 1.0 / x_ref.shape[0]
    xb = x_ref[...].astype(jnp.bfloat16)

    # fc1 (bias cancelled by BN) -> bn1 -> leaky_relu
    a1 = jnp.dot(xb, w_ref[0:in_dim, :h0p], preferred_element_type=jnp.float32)
    s1 = jnp.sum(a1, axis=0, keepdims=True)
    q1 = jnp.sum(a1 * a1, axis=0, keepdims=True)
    h1 = _bn_lrelu_from_stats(a1, s1, q1, vec_ref[0:1, :h0p], vec_ref[1:2, :h0p], inv_b)

    # fc2 (bias cancelled) -> bn2 -> leaky_relu
    r2 = in_p
    a2 = jnp.dot(h1.astype(jnp.bfloat16), w_ref[r2:r2 + h0p, :h1p],
                 preferred_element_type=jnp.float32)
    s2 = jnp.sum(a2, axis=0, keepdims=True)
    q2 = jnp.sum(a2 * a2, axis=0, keepdims=True)
    h2 = _bn_lrelu_from_stats(a2, s2, q2, vec_ref[2:3, :h1p], vec_ref[3:4, :h1p], inv_b)

    # fc3 -> tanh  (lane-padded output; pad cols get tanh(0)=0)
    r3 = in_p + h0p
    a3 = jnp.dot(h2.astype(jnp.bfloat16), w_ref[r3:r3 + h1p, :out_p],
                 preferred_element_type=jnp.float32)
    a3 = a3 + vec_ref[4:5, :out_p]
    out_ref[...] = jnp.tanh(a3).astype(out_ref.dtype)


# ---------------------------------------------------------------------------
# Batch-tiled path: train-mode BN needs full-batch stats, so three gridded
# passes with HBM-resident intermediate (pre-BN) activations.
# ---------------------------------------------------------------------------
def _linear_stats_kernel(x_ref, w_ref, a_ref, stats_ref):
    """a = x @ w per batch tile; accumulate batch sum / sum-sq of a."""
    i = pl.program_id(0)
    a = jnp.dot(x_ref[...].astype(jnp.bfloat16), w_ref[...],
                preferred_element_type=jnp.float32)
    a_ref[...] = a

    @pl.when(i == 0)
    def _():
        stats_ref[...] = jnp.zeros_like(stats_ref)

    stats_ref[0:1, :] += jnp.sum(a, axis=0, keepdims=True)
    stats_ref[1:2, :] += jnp.sum(a * a, axis=0, keepdims=True)


def _bn_linear_stats_kernel(a_ref, stats_in_ref, vec_ref, w_ref,
                            a2_ref, stats_out_ref, *, inv_b):
    """BN(prev stats) + lrelu -> @ w ; accumulate stats of the new activation."""
    i = pl.program_id(0)
    h = _bn_lrelu_from_stats(a_ref[...], stats_in_ref[0:1, :], stats_in_ref[1:2, :],
                             vec_ref[0:1, :], vec_ref[1:2, :], inv_b)
    a2 = jnp.dot(h.astype(jnp.bfloat16), w_ref[...],
                 preferred_element_type=jnp.float32)
    a2_ref[...] = a2

    @pl.when(i == 0)
    def _():
        stats_out_ref[...] = jnp.zeros_like(stats_out_ref)

    stats_out_ref[0:1, :] += jnp.sum(a2, axis=0, keepdims=True)
    stats_out_ref[1:2, :] += jnp.sum(a2 * a2, axis=0, keepdims=True)


def _bn_linear_tanh_kernel(a_ref, stats_ref, vec_ref, w_ref, b3_ref, out_ref, *,
                           inv_b):
    """BN(prev stats) + lrelu -> @ w3 + b3 -> tanh."""
    h = _bn_lrelu_from_stats(a_ref[...], stats_ref[0:1, :], stats_ref[1:2, :],
                             vec_ref[0:1, :], vec_ref[1:2, :], inv_b)
    a3 = jnp.dot(h.astype(jnp.bfloat16), w_ref[...],
                 preferred_element_type=jnp.float32) + b3_ref[...]
    out_ref[...] = jnp.tanh(a3).astype(out_ref.dtype)


# ---------------------------------------------------------------------------
# Param preparation (one-time; hoisted out of the per-call wrapper).
# ---------------------------------------------------------------------------
def prepare_actor_params(params):
    w1, w2, w3 = params["w1"], params["w2"], params["w3"]
    in_dim, h0 = w1.shape
    h1 = w2.shape[1]
    out_dim = w3.shape[1]

    h0p = _round_up(h0, 128)
    h1p = _round_up(h1, 128)
    out_p = _round_up(out_dim, 128)
    fmax = max(h0p, h1p, out_p)
    in_p = _round_up(in_dim, 16)          # bf16 sublane-pack alignment

    def _pad2(w, rows, cols):
        return jnp.pad(w, ((0, rows - w.shape[0]), (0, cols - w.shape[1])))

    def _row(v, width):
        v = v.reshape(1, -1)
        return jnp.pad(v, ((0, 0), (0, width - v.shape[1])))   # ZERO pad (required)

    # One sublane-concatenated bf16 weight slab -> single weight DMA (fused path).
    w_slab = jnp.concatenate(
        [_pad2(w1, in_p, fmax), _pad2(w2, h0p, fmax), _pad2(w3, h1p, fmax)],
        axis=0).astype(jnp.bfloat16)

    # Packed per-feature vectors (b1/b2 omitted: cancelled by train-mode BN).
    vec = jnp.concatenate(
        [_row(params["g1"], fmax), _row(params["be1"], fmax),
         _row(params["g2"], fmax), _row(params["be2"], fmax),
         _row(params["b3"], fmax)], axis=0).astype(jnp.float32)

    return {
        "dims": dict(in_dim=in_dim, in_p=in_p, h0=h0, h0p=h0p, h1=h1, h1p=h1p,
                     out_dim=out_dim, out_p=out_p, fmax=fmax),
        # fused path
        "w_slab": w_slab,
        "vec": vec,
        # batch-tiled path (per-layer lane-padded pieces; tiny, duplicated on purpose)
        "w1p": _pad2(w1, in_dim, h0p).astype(jnp.bfloat16),
        "w2p": _pad2(w2, h0p, h1p).astype(jnp.bfloat16),
        "w3p": _pad2(w3, h1p, out_p).astype(jnp.bfloat16),
        "vec1": jnp.concatenate([_row(params["g1"], h0p),
                                 _row(params["be1"], h0p)], 0).astype(jnp.float32),
        "vec2": jnp.concatenate([_row(params["g2"], h1p),
                                 _row(params["be2"], h1p)], 0).astype(jnp.float32),
        "b3p": _row(params["b3"], out_p).astype(jnp.float32),
    }


# ---------------------------------------------------------------------------
# Forward wrappers.
# ---------------------------------------------------------------------------
def _actor_fused(x, p, out_dtype):
    d = p["dims"]
    B = x.shape[0]
    kernel = functools.partial(
        _actor_fused_kernel, in_dim=d["in_dim"], in_p=d["in_p"],
        h0p=d["h0p"], h1p=d["h1p"], out_p=d["out_p"])
    return pl.pallas_call(
        kernel,
        out_shape=jax.ShapeDtypeStruct((B, d["out_p"]), out_dtype),
        in_specs=[_VMEM, _VMEM, _VMEM],
        out_specs=_VMEM,
        compiler_params=pltpu.CompilerParams(vmem_limit_bytes=_VMEM_LIMIT),
    )(x, p["w_slab"], p["vec"])


def _actor_tiled(x, p, tb, out_dtype):
    d = p["dims"]
    B = x.shape[0]
    nb = B // tb
    inv_b = 1.0 / B

    cp_arb = pltpu.CompilerParams(dimension_semantics=("arbitrary",),
                                  vmem_limit_bytes=_VMEM_LIMIT)
    cp_par = pltpu.CompilerParams(dimension_semantics=("parallel",),
                                  vmem_limit_bytes=_VMEM_LIMIT)

    def tile_spec(cols):
        return pl.BlockSpec((tb, cols), lambda i: (i, 0))

    def full_spec(shape):
        return pl.BlockSpec(shape, lambda i: (0,) * len(shape))

    # Pass 1: a1 = x @ w1 (raw, pre-BN) + full-batch sum / sum-sq of a1.
    a1, st1 = pl.pallas_call(
        _linear_stats_kernel,
        grid=(nb,),
        out_shape=(jax.ShapeDtypeStruct((B, d["h0p"]), jnp.float32),
                   jax.ShapeDtypeStruct((2, d["h0p"]), jnp.float32)),
        in_specs=[tile_spec(d["in_dim"]), full_spec(p["w1p"].shape)],
        out_specs=(tile_spec(d["h0p"]), full_spec((2, d["h0p"]))),
        compiler_params=cp_arb,
    )(x, p["w1p"])

    # Pass 2: bn1 + lrelu -> a2 = h1 @ w2, plus stats of a2.
    a2, st2 = pl.pallas_call(
        functools.partial(_bn_linear_stats_kernel, inv_b=inv_b),
        grid=(nb,),
        out_shape=(jax.ShapeDtypeStruct((B, d["h1p"]), jnp.float32),
                   jax.ShapeDtypeStruct((2, d["h1p"]), jnp.float32)),
        in_specs=[tile_spec(d["h0p"]), full_spec((2, d["h0p"])),
                  full_spec(p["vec1"].shape), full_spec(p["w2p"].shape)],
        out_specs=(tile_spec(d["h1p"]), full_spec((2, d["h1p"]))),
        compiler_params=cp_arb,
    )(a1, st1, p["vec1"], p["w2p"])

    # Pass 3: bn2 + lrelu -> @ w3 + b3 -> tanh. Pure map over the batch.
    out = pl.pallas_call(
        functools.partial(_bn_linear_tanh_kernel, inv_b=inv_b),
        grid=(nb,),
        out_shape=jax.ShapeDtypeStruct((B, d["out_p"]), out_dtype),
        in_specs=[tile_spec(d["h1p"]), full_spec((2, d["h1p"])),
                  full_spec(p["vec2"].shape), full_spec(p["w3p"].shape),
                  full_spec(p["b3p"].shape)],
        out_specs=tile_spec(d["out_p"]),
        compiler_params=cp_par,
    )(a2, st2, p["vec2"], p["w3p"], p["b3p"])
    return out


def _pick_batch_tile(B):
    if B <= _FUSED_MAX_B:
        return None
    for t in _TILE_CANDIDATES:
        if B % t == 0:
            return t
    # TODO(synk): ragged large batches fall back to the fused path; pad-free
    # masking of the last tile would be needed for a fully general tiled path.
    return None


def actor_forward(x, prepared, *, out_dtype=jnp.float32):
    """x: [B, 2*state_dim] f32. prepared: output of prepare_actor_params()."""
    d = prepared["dims"]
    B = x.shape[0]
    tb = _pick_batch_tile(B)
    if tb is None:
        out = _actor_fused(x, prepared, out_dtype)
    else:
        out = _actor_tiled(x, prepared, tb, out_dtype)
    # TODO(synk): bandwidth-sensitive consumers can take the padded slab
    # directly (and/or out_dtype=bf16) to skip this extra slice pass.
    return out[:, :d["out_dim"]]


# ---------------------------------------------------------------------------
# Init + references.
# ---------------------------------------------------------------------------
def init_actor_params(key, state_dim, hidden_dim, output_dim):
    """Deterministic init mimicking Actor.reset_parameters semantics."""
    in_dim = 2 * state_dim
    h0, h1 = hidden_dim
    keys = jax.random.split(key, 6)

    # hidden_init uses weight.size()[0] == out_features in PyTorch layout.
    lim1 = 1.0 / jnp.sqrt(jnp.float32(h0))
    lim2 = 1.0 / jnp.sqrt(jnp.float32(h1))

    return {
        # weights stored [in, out] so the kernel can do x @ W
        "w1": jax.random.uniform(keys[0], (in_dim, h0), jnp.float32, -lim1, lim1),
        "b1": jax.random.uniform(keys[1], (h0,), jnp.float32, -lim1, lim1),  # cancelled by BN
        "g1": jnp.ones((h0,), jnp.float32),
        "be1": jnp.zeros((h0,), jnp.float32),
        "w2": jax.random.uniform(keys[2], (h0, h1), jnp.float32, -lim2, lim2),
        "b2": jax.random.uniform(keys[3], (h1,), jnp.float32, -lim2, lim2),  # cancelled by BN
        "g2": jnp.ones((h1,), jnp.float32),
        "be2": jnp.zeros((h1,), jnp.float32),
        "w3": jax.random.uniform(keys[4], (h1, output_dim), jnp.float32, -0.003, 0.003),
        "b3": jax.random.uniform(keys[5], (output_dim,), jnp.float32, -0.003, 0.003),
    }


def actor_reference_f32(x, p):
    """Full-precision reference with the original PyTorch semantics (incl. b1/b2)."""
    def bn(h, g, b):
        m = h.mean(0, keepdims=True)
        v = ((h - m) ** 2).mean(0, keepdims=True)
        return (h - m) / jnp.sqrt(v + BN_EPS) * g + b

    def lrelu(h):
        return jnp.where(h >= 0, h, LEAKY_SLOPE * h)

    h = lrelu(bn(x @ p["w1"] + p["b1"], p["g1"], p["be1"]))
    h = lrelu(bn(h @ p["w2"] + p["b2"], p["g2"], p["be2"]))
    return jnp.tanh(h @ p["w3"] + p["b3"])


def actor_reference_bf16(x, p):
    """Reference matching the kernel's bf16-matmul / folded-BN arithmetic."""
    def dot16(a, w):
        return jnp.dot(a.astype(jnp.bfloat16), w.astype(jnp.bfloat16),
                       preferred_element_type=jnp.float32)

    def bn_lrelu(h, g, b):
        m = h.mean(0, keepdims=True)
        v = jnp.maximum((h * h).mean(0, keepdims=True) - m * m, 0.0)
        scale = g * lax.rsqrt(v + BN_EPS)
        y = h * scale + (b - m * scale)
        return jnp.maximum(y, LEAKY_SLOPE * y)

    h = bn_lrelu(dot16(x, p["w1"]), p["g1"], p["be1"])
    h = bn_lrelu(dot16(h, p["w2"]), p["g2"], p["be2"])
    return jnp.tanh(dot16(h, p["w3"]) + p["b3"])


if __name__ == "__main__":
    key = jax.random.PRNGKey(0)
    k_in, k_par, k_big = jax.random.split(key, 3)

    # Small shapes consistent with the module.
    state_dim = 16          # -> input features = 2*state_dim = 32
    hidden_dim = (32, 64)
    output_dim = 8
    batch = 8

    x = jax.random.normal(k_in, (batch, 2 * state_dim), jnp.float32)
    params = init_actor_params(k_par, state_dim, hidden_dim, output_dim)
    prepared = prepare_actor_params(params)      # one-time prep (hoisted)

    # Fused single-shot path (small batch).
    out = jax.block_until_ready(actor_forward(x, prepared))
    assert out.shape == (batch, output_dim)

    ref16 = actor_reference_bf16(x, params)      # mirrors kernel arithmetic
    assert jnp.allclose(out, ref16, atol=1e-3, rtol=1e-3)
    ref32 = actor_reference_f32(x, params)       # PyTorch-semantics f32 reference
    assert jnp.allclose(out, ref32, atol=3e-2, rtol=3e-2)

    # Batch-tiled (gridded) path for large B.
    big_b = 1024
    xb = jax.random.normal(k_big, (big_b, 2 * state_dim), jnp.float32)
    out_b = jax.block_until_ready(actor_forward(xb, prepared))
    assert out_b.shape == (big_b, output_dim)
    ref_b = actor_reference_bf16(xb, params)
    assert jnp.allclose(out_b, ref_b, atol=5e-3, rtol=5e-3)

    print("KERNEL_OK")
</pallas_src>

<mosaic_0001>
module attributes {stable_mosaic.version = 11 : i64} {
  func.func @_actor_fused_kernel(%arg0: memref<8x32xf32, #tpu.memory_space<vmem>>, %arg1: memref<288x128xbf16, #tpu.memory_space<vmem>>, %arg2: memref<5x128xf32, #tpu.memory_space<vmem>>, %arg3: memref<8x128xf32, #tpu.memory_space<vmem>>) attributes {dimension_semantics = [], scalar_prefetch = 0 : i64, scratch_operands = 0 : i64, tpu.core_type = #tpu.core_type<tc>} {
    %c0 = arith.constant 0 : index
    %c0_0 = arith.constant 0 : index
    %0 = vector.load %arg0[%c0, %c0_0] : memref<8x32xf32, #tpu.memory_space<vmem>>, vector<8x32xf32>
    %1 = arith.truncf %0 : vector<8x32xf32> to vector<8x32xbf16>
    %c0_1 = arith.constant 0 : index
    %c0_2 = arith.constant 0 : index
    %2 = vector.load %arg1[%c0_1, %c0_2] : memref<288x128xbf16, #tpu.memory_space<vmem>>, vector<32x128xbf16>
    %cst = arith.constant dense<0.000000e+00> : vector<8x128xf32>
    %3 = tpu.matmul %1, %2, %cst {dimension_numbers = #tpu.dot_dimension_numbers<[1], [0], [0], [1], [0, 0, 1, 1], [], []>} : vector<8x32xbf16>, vector<32x128xbf16>, vector<8x128xf32> -> vector<8x128xf32>
    %cst_3 = arith.constant dense<0.000000e+00> : vector<128xf32>
    %4 = vector.multi_reduction <add>, %3, %cst_3 [0] : vector<8x128xf32> to vector<128xf32>
    %5 = vector.shape_cast %4 : vector<128xf32> to vector<1x128xf32>
    %6 = arith.mulf %3, %3 : vector<8x128xf32>
    %cst_4 = arith.constant dense<0.000000e+00> : vector<128xf32>
    %7 = vector.multi_reduction <add>, %6, %cst_4 [0] : vector<8x128xf32> to vector<128xf32>
    %8 = vector.shape_cast %7 : vector<128xf32> to vector<1x128xf32>
    %c0_5 = arith.constant 0 : index
    %c0_6 = arith.constant 0 : index
    %9 = vector.load %arg2[%c0_5, %c0_6] : memref<5x128xf32, #tpu.memory_space<vmem>>, vector<1x128xf32>
    %c1 = arith.constant 1 : index
    %c0_7 = arith.constant 0 : index
    %10 = vector.load %arg2[%c1, %c0_7] : memref<5x128xf32, #tpu.memory_space<vmem>>, vector<1x128xf32>
    %cst_8 = arith.constant 1.250000e-01 : f32
    %11 = vector.broadcast %cst_8 : f32 to vector<1x128xf32>
    %12 = arith.mulf %5, %11 : vector<1x128xf32>
    %cst_9 = arith.constant 1.250000e-01 : f32
    %13 = vector.broadcast %cst_9 : f32 to vector<1x128xf32>
    %14 = arith.mulf %8, %13 : vector<1x128xf32>
    %15 = arith.mulf %12, %12 : vector<1x128xf32>
    %16 = arith.subf %14, %15 : vector<1x128xf32>
    %cst_10 = arith.constant 0.000000e+00 : f32
    %17 = vector.broadcast %cst_10 : f32 to vector<1x128xf32>
    %18 = arith.maximumf %16, %17 : vector<1x128xf32>
    %cst_11 = arith.constant 9.99999974E-6 : f32
    %19 = vector.broadcast %cst_11 : f32 to vector<1x128xf32>
    %20 = arith.addf %18, %19 : vector<1x128xf32>
    %21 = math.rsqrt %20 : vector<1x128xf32>
    %22 = arith.mulf %9, %21 : vector<1x128xf32>
    %23 = arith.mulf %12, %22 : vector<1x128xf32>
    %24 = arith.subf %10, %23 : vector<1x128xf32>
    %25 = vector.broadcast %22 : vector<1x128xf32> to vector<8x128xf32>
    %26 = arith.mulf %3, %25 : vector<8x128xf32>
    %27 = vector.broadcast %24 : vector<1x128xf32> to vector<8x128xf32>
    %28 = arith.addf %26, %27 : vector<8x128xf32>
    %cst_12 = arith.constant 0.00999999977 : f32
    %29 = vector.broadcast %cst_12 : f32 to vector<8x128xf32>
    %30 = arith.mulf %29, %28 : vector<8x128xf32>
    %31 = arith.maximumf %28, %30 : vector<8x128xf32>
    %32 = arith.truncf %31 : vector<8x128xf32> to vector<8x128xbf16>
    %c32 = arith.constant 32 : index
    %c0_13 = arith.constant 0 : index
    %33 = vector.load %arg1[%c32, %c0_13] : memref<288x128xbf16, #tpu.memory_space<vmem>>, vector<128x128xbf16>
    %cst_14 = arith.constant dense<0.000000e+00> : vector<8x128xf32>
    %34 = tpu.matmul %32, %33, %cst_14 {dimension_numbers = #tpu.dot_dimension_numbers<[1], [0], [0], [1], [0, 0, 1, 1], [], []>} : vector<8x128xbf16>, vector<128x128xbf16>, vector<8x128xf32> -> vector<8x128xf32>
    %cst_15 = arith.constant dense<0.000000e+00> : vector<128xf32>
    %35 = vector.multi_reduction <add>, %34, %cst_15 [0] : vector<8x128xf32> to vector<128xf32>
    %36 = vector.shape_cast %35 : vector<128xf32> to vector<1x128xf32>
    %37 = arith.mulf %34, %34 : vector<8x128xf32>
    %cst_16 = arith.constant dense<0.000000e+00> : vector<128xf32>
    %38 = vector.multi_reduction <add>, %37, %cst_16 [0] : vector<8x128xf32> to vector<128xf32>
    %39 = vector.shape_cast %38 : vector<128xf32> to vector<1x128xf32>
    %c2 = arith.constant 2 : index
    %c0_17 = arith.constant 0 : index
    %40 = vector.load %arg2[%c2, %c0_17] : memref<5x128xf32, #tpu.memory_space<vmem>>, vector<1x128xf32>
    %c3 = arith.constant 3 : index
    %c0_18 = arith.constant 0 : index
    %41 = vector.load %arg2[%c3, %c0_18] : memref<5x128xf32, #tpu.memory_space<vmem>>, vector<1x128xf32>
    %cst_19 = arith.constant 1.250000e-01 : f32
    %42 = vector.broadcast %cst_19 : f32 to vector<1x128xf32>
    %43 = arith.mulf %36, %42 : vector<1x128xf32>
    %cst_20 = arith.constant 1.250000e-01 : f32
    %44 = vector.broadcast %cst_20 : f32 to vector<1x128xf32>
    %45 = arith.mulf %39, %44 : vector<1x128xf32>
    %46 = arith.mulf %43, %43 : vector<1x128xf32>
    %47 = arith.subf %45, %46 : vector<1x128xf32>
    %cst_21 = arith.constant 0.000000e+00 : f32
    %48 = vector.broadcast %cst_21 : f32 to vector<1x128xf32>
    %49 = arith.maximumf %47, %48 : vector<1x128xf32>
    %cst_22 = arith.constant 9.99999974E-6 : f32
    %50 = vector.broadcast %cst_22 : f32 to vector<1x128xf32>
    %51 = arith.addf %49, %50 : vector<1x128xf32>
    %52 = math.rsqrt %51 : vector<1x128xf32>
    %53 = arith.mulf %40, %52 : vector<1x128xf32>
    %54 = arith.mulf %43, %53 : vector<1x128xf32>
    %55 = arith.subf %41, %54 : vector<1x128xf32>
    %56 = vector.broadcast %53 : vector<1x128xf32> to vector<8x128xf32>
    %57 = arith.mulf %34, %56 : vector<8x128xf32>
    %58 = vector.broadcast %55 : vector<1x128xf32> to vector<8x128xf32>
    %59 = arith.addf %57, %58 : vector<8x128xf32>
    %cst_23 = arith.constant 0.00999999977 : f32
    %60 = vector.broadcast %cst_23 : f32 to vector<8x128xf32>
    %61 = arith.mulf %60, %59 : vector<8x128xf32>
    %62 = arith.maximumf %59, %61 : vector<8x128xf32>
    %63 = arith.truncf %62 : vector<8x128xf32> to vector<8x128xbf16>
    %c160 = arith.constant 160 : index
    %c0_24 = arith.constant 0 : index
    %64 = vector.load %arg1[%c160, %c0_24] : memref<288x128xbf16, #tpu.memory_space<vmem>>, vector<128x128xbf16>
    %cst_25 = arith.constant dense<0.000000e+00> : vector<8x128xf32>
    %65 = tpu.matmul %63, %64, %cst_25 {dimension_numbers = #tpu.dot_dimension_numbers<[1], [0], [0], [1], [0, 0, 1, 1], [], []>} : vector<8x128xbf16>, vector<128x128xbf16>, vector<8x128xf32> -> vector<8x128xf32>
    %c4 = arith.constant 4 : index
    %c0_26 = arith.constant 0 : index
    %66 = vector.load %arg2[%c4, %c0_26] : memref<5x128xf32, #tpu.memory_space<vmem>>, vector<1x128xf32>
    %67 = vector.broadcast %66 : vector<1x128xf32> to vector<8x128xf32>
    %68 = arith.addf %65, %67 : vector<8x128xf32>
    %69 = math.tanh %68 : vector<8x128xf32>
    %c0_27 = arith.constant 0 : index
    %c0_28 = arith.constant 0 : index
    %70 = vector.load %arg3[%c0_27, %c0_28] : memref<8x128xf32, #tpu.memory_space<vmem>>, vector<8x128xf32>
    tpu.vector_store %arg3[%c0_27, %c0_28], %69 {strides = array<i32>} : memref<8x128xf32, #tpu.memory_space<vmem>>, vector<8x128xf32>,
    return
  }
}

</mosaic_0001>

<llo_original>
// kernel: tpu_custom_call.1
$region0: #{tpu_custom_call.1}
  #allocation0 [shape = 'u32[]', space=smem, size = 0x4, offset = 0x4, fixed_abs, tag = 'smem constant byte address 0x4 - core index']
  #allocation1 [shape = 'u32[72,128]{1,0:T(1,128)}', space=vmem, size = 0x9000, scoped, tag = 'internal scratch']
  %s0 = inlined_call_operand.hbm [shape: f32[8,32], index: 0, kind: input, shape index: {}]
  %s1 = inlined_call_operand.hbm [shape: bf16[288,128], index: 1, kind: input, shape index: {}]
  %s2 = inlined_call_operand.hbm [shape: f32[5,128], index: 2, kind: input, shape index: {}]
  %s3 = inlined_call_operand.hbm [shape: f32[8,128], index: 3, kind: output, shape index: {}]
  %s4 = sld [smem:[#allocation0]]
  $region34: #{tpu_custom_call.1} parent=0
    _
  %s6 = ssub.s32 1, %s4
  %s7 = scalar_select 0, %s6, %s4
  $region1: #{tpu_custom_call.1} parent=0
    #allocation2 [shape = 'u8[4096]{0}', space=vmem, size = 0x1000, scoped, tag = 'input window, operand 0, single buffered']
    #allocation3 [shape = 's32[1]{0}', space=sflag, size = 0x4, scoped, tag = 'scoped memory for tpu_custom_call.1']
    #allocation4 [shape = 's32[1]{0}', space=sflag, size = 0x4, scoped, tag = 'scoped memory for tpu_custom_call.1']
    #allocation5 [shape = 'u8[73728]{0}', space=vmem, size = 0x12000, scoped, tag = 'input window, operand 1, single buffered']
    #allocation6 [shape = 's32[1]{0}', space=sflag, size = 0x4, scoped, tag = 'scoped memory for tpu_custom_call.1']
    #allocation7 [shape = 'u8[4096]{0}', space=vmem, size = 0x1000, scoped, tag = 'input window, operand 2, single buffered']
    #allocation8 [shape = 'u8[4096]{0}', space=vmem, size = 0x1000, scoped, tag = 'output window, operand 0, single buffered']
    %8 = vsyncpa [#allocation3], 0
    %9 = vsyncpa [#allocation6], 0
    %10 = vsyncpa [#allocation4], 0
    // Predicated region
    $region2: #{tpu_custom_call.1} parent=1 // pred_check
      _
    $region3: #{tpu_custom_call.1} parent=1 // pred_check_branch
      %12 = sbr.rel (0) target = $region5
    $region4: #{tpu_custom_call.1} parent=1 // pred_region
      %14 = vsyncadd [#allocation3], 0
      %s16 = sshll.u32 %s0, 4
      %s17 = int_to_ptr.hbm [resolvable:$true] %s16
      %s18 = sshll.u32 [#allocation2], 4
      %s19 = int_to_ptr.vmem [resolvable:$true] %s18
      %21 = dma.hbm_to_vmem [thread:$0]  %s17, 128, %s19, [#allocation3]
    $region5: #{tpu_custom_call.1} parent=1 // pred_fallthru
      _
    // Predicated region
    $region6: #{tpu_custom_call.1} parent=1 // pred_check
      _
    $region7: #{tpu_custom_call.1} parent=1 // pred_check_branch
      %23 = sbr.rel (0) target = $region9
    $region8: #{tpu_custom_call.1} parent=1 // pred_region
      %25 = vsyncadd [#allocation6], 0
      %s26 = sshll.u32 %s1, 4
      %s27 = int_to_ptr.hbm [resolvable:$true] %s26
      %s28 = sshll.u32 [#allocation5], 4
      %s29 = int_to_ptr.vmem [resolvable:$true] %s28
      %34 = dma.hbm_to_vmem [thread:$0]  %s27, 2304, %s29, [#allocation6], 64, 64, 4
    $region9: #{tpu_custom_call.1} parent=1 // pred_fallthru
      _
    // Predicated region
    $region10: #{tpu_custom_call.1} parent=1 // pred_check
      _
    $region11: #{tpu_custom_call.1} parent=1 // pred_check_branch
      %36 = sbr.rel (0) target = $region13
    $region12: #{tpu_custom_call.1} parent=1 // pred_region
      %38 = vsyncadd [#allocation6], 0
      %s40 = sshll.u32 %s2, 4
      %s41 = int_to_ptr.hbm [resolvable:$true] %s40
      %s42 = sshll.u32 [#allocation7], 4
      %s43 = int_to_ptr.vmem [resolvable:$true] %s42
      %45 = dma.hbm_to_vmem [thread:$0]  %s41, 128, %s43, [#allocation6]
    $region13: #{tpu_custom_call.1} parent=1 // pred_fallthru
      _
    // Predicated region
    $region14: #{tpu_custom_call.1} parent=1 // pred_check
      _
    $region15: #{tpu_custom_call.1} parent=1 // pred_check_branch
      %47 = sbr.rel (0) target = $region17
    $region16: #{tpu_custom_call.1} parent=1 // pred_region
      %49 = dma.done [#allocation3], 128
    $region17: #{tpu_custom_call.1} parent=1 // pred_fallthru
      _
    // Predicated region
    $region18: #{tpu_custom_call.1} parent=1 // pred_check
      _
    $region19: #{tpu_custom_call.1} parent=1 // pred_check_branch
      %51 = sbr.rel (0) target = $region21
    $region20: #{tpu_custom_call.1} parent=1 // pred_region
      %53 = dma.done [#allocation6], 2304
    $region21: #{tpu_custom_call.1} parent=1 // pred_fallthru
      _
    // Predicated region
    $region22: #{tpu_custom_call.1} parent=1 // pred_check
      _
    $region23: #{tpu_custom_call.1} parent=1 // pred_check_branch
      %55 = sbr.rel (0) target = $region25
    $region24: #{tpu_custom_call.1} parent=1 // pred_region
      %57 = dma.done [#allocation6], 128
    $region25: #{tpu_custom_call.1} parent=1 // pred_fallthru
      _
    %v59 = vld [vmem:[#allocation2] sm:$0xff]
    %v60 = vpack.c.bf16 %v59, %v59
    %v61 = vld [vmem:[#allocation5] sm:$0xf]
    %v62 = vld [vmem:[#allocation5 + $0x4] sm:$0xf]
    %v63 = vld [vmem:[#allocation5 + $0x8] sm:$0xf]
    %v64 = vld [vmem:[#allocation5 + $0xc] sm:$0xf]
    %v69 = vunpack.c.l.b16 %v61
    %v70 = vunpack.c.l.b16 %v62
    %v71 = vunpack.c.l.b16 %v63
    %v72 = vunpack.c.l.b16 %v64
    %v73 = vpack.c.b16 %v70, %v69
    %v74 = vpack.c.b16 %v72, %v71
    %vm77 = vcmask 261120
    %v79 = vsel %vm77, %v60, 0
    %81 = vmatpush.bf16.msra.mxu0 0
    %82 = vmatpush.bf16.msra.mxu0 0
    %83 = vmatpush.bf16.msra.mxu0 0
    %84 = vmatpush.bf16.msra.mxu0 0
    %85 = vmatpush.bf16.msra.mxu0 0
    %86 = vmatpush.bf16.msra.mxu0 0
    %87 = vmatpush.bf16.msra.mxu0 %v74
    %88 = vmatpush.bf16.msra.mxu0 %v73
    %89 = vmatmul.bf16.gmra.mxu0 %v79
    %v90 = vpop.f32.mrf.mxu0
    %v91 = vadd.f32 0.0, %v90
    %v92 = vpop.f32.mrf.mxu0
    %93 = vdwg.mxu0
    %v94 = vrot.slane %v91, 4
    %v95 = vadd.f32 %v91, %v94
    %v96 = vrot.slane %v95, 2
    %v97 = vadd.f32 %v95, %v96
    %v98 = vrot.slane %v97, 1
    %v99 = vadd.f32 %v97, %v98
    %v100 = vmul.f32 %v91, %v91
    %v101 = vrot.slane %v100, 4
    %v102 = vadd.f32 %v100, %v101
    %v103 = vrot.slane %v102, 2
    %v104 = vadd.f32 %v102, %v103
    %v105 = vrot.slane %v104, 1
    %v106 = vadd.f32 %v104, %v105
    %v107 = vld [vmem:[#allocation7] sm:$0x1]
    %v108 = vld [vmem:[#allocation7 + $0x1] sm:$0x1]
    %v109 = vmul.f32 %v99, 0.125
    %v110 = vmul.f32 %v106, 0.125
    %v111 = vmul.f32 %v109, %v109
    %v112 = vsub.f32 %v110, %v111
    %v113 = vmax.f32 %v112, 0.0
    %v114 = vadd.f32 %v113, 1e-05
    %v115 = vrsqrt.pop %v114
    %v116 = vmul.f32 %v115, %v114
    %v117 = vmul.f32 %v116, %v115
    %v118 = vmul.f32 0.5, %v117
    %v119 = vsub.f32 1.5, %v118
    %v120 = vmul.f32 %v115, %v119
    %vm121 = vweird.f32 %v114
    %vm122 = vweird.f32 %v115
    %vm123 = vmor %vm121, %vm122
    %v124 = vsel %vm123, %v115, %v120
    %v125 = vmul.f32 %v107, %v124
    %v126 = vmul.f32 %v109, %v125
    %v127 = vsub.f32 %v108, %v126
    %v128 = vperm.slane %v125, 0
    %v129 = vmul.f32 %v91, %v128
    %v130 = vperm.slane %v127, 0
    %v131 = vadd.f32 %v129, %v130
    %v132 = vmul.f32 %v131, 0.01
    %v133 = vmax.f32 %v131, %v132
    %v134 = vpack.c.bf16 %v133, %v133
    %v135 = vld [vmem:[#allocation5 + $0x10] sm:$0xf]
    %v136 = vld [vmem:[#allocation5 + $0x14] sm:$0xf]
    %v137 = vld [vmem:[#allocation5 + $0x18] sm:$0xf]
    %v138 = vld [vmem:[#allocation5 + $0x1c] sm:$0xf]
    %v139 = vld [vmem:[#allocation5 + $0x20] sm:$0xf]
    %v140 = vld [vmem:[#allocation5 + $0x24] sm:$0xf]
    %v141 = vld [vmem:[#allocation5 + $0x28] sm:$0xf]
    %v142 = vld [vmem:[#allocation5 + $0x2c] sm:$0xf]
    %v143 = vld [vmem:[#allocation5 + $0x30] sm:$0xf]
    %v144 = vld [vmem:[#allocation5 + $0x34] sm:$0xf]
    %v145 = vld [vmem:[#allocation5 + $0x38] sm:$0xf]
    %v146 = vld [vmem:[#allocation5 + $0x3c] sm:$0xf]
    %v147 = vld [vmem:[#allocation5 + $0x40] sm:$0xf]
    %v148 = vld [vmem:[#allocation5 + $0x44] sm:$0xf]
    %v149 = vld [vmem:[#allocation5 + $0x48] sm:$0xf]
    %v150 = vld [vmem:[#allocation5 + $0x4c] sm:$0xf]
    %v167 = vunpack.c.l.b16 %v135
    %v168 = vunpack.c.l.b16 %v136
    %v169 = vunpack.c.l.b16 %v137
    %v170 = vunpack.c.l.b16 %v138
    %v171 = vunpack.c.l.b16 %v139
    %v172 = vunpack.c.l.b16 %v140
    %v173 = vunpack.c.l.b16 %v141
    %v174 = vunpack.c.l.b16 %v142
    %v175 = vunpack.c.l.b16 %v143
    %v176 = vunpack.c.l.b16 %v144
    %v177 = vunpack.c.l.b16 %v145
    %v178 = vunpack.c.l.b16 %v146
    %v179 = vunpack.c.l.b16 %v147
    %v180 = vunpack.c.l.b16 %v148
    %v181 = vunpack.c.l.b16 %v149
    %v182 = vunpack.c.l.b16 %v150
    %v183 = vpack.c.b16 %v168, %v167
    %v184 = vpack.c.b16 %v170, %v169
    %v185 = vpack.c.b16 %v172, %v171
    %v186 = vpack.c.b16 %v174, %v173
    %v187 = vpack.c.b16 %v176, %v175
    %v188 = vpack.c.b16 %v178, %v177
    %v189 = vpack.c.b16 %v180, %v179
    %v190 = vpack.c.b16 %v182, %v181
    %199 = vmatpush.bf16.msra.mxu0 %v190
    %200 = vmatpush.bf16.msra.mxu0 %v189
    %201 = vmatpush.bf16.msra.mxu0 %v188
    %202 = vmatpush.bf16.msra.mxu0 %v187
    %203 = vmatpush.bf16.msra.mxu0 %v186
    %204 = vmatpush.bf16.msra.mxu0 %v185
    %205 = vmatpush.bf16.msra.mxu0 %v184
    %206 = vmatpush.bf16.msra.mxu0 %v183
    %207 = vmatmul.bf16.gmra.mxu0 %v134
    %v208 = vpop.f32.mrf.mxu0
    %v209 = vadd.f32 0.0, %v208
    %v210 = vpop.f32.mrf.mxu0
    %211 = vdwg.mxu0
    %v212 = vrot.slane %v209, 4
    %v213 = vadd.f32 %v209, %v212
    %v214 = vrot.slane %v213, 2
    %v215 = vadd.f32 %v213, %v214
    %v216 = vrot.slane %v215, 1
    %v217 = vadd.f32 %v215, %v216
    %v218 = vmul.f32 %v209, %v209
    %v219 = vrot.slane %v218, 4
    %v220 = vadd.f32 %v218, %v219
    %v221 = vrot.slane %v220, 2
    %v222 = vadd.f32 %v220, %v221
    %v223 = vrot.slane %v222, 1
    %v224 = vadd.f32 %v222, %v223
    %v225 = vld [vmem:[#allocation7 + $0x2] sm:$0x1]
    %v226 = vld [vmem:[#allocation7 + $0x3] sm:$0x1]
    %v227 = vmul.f32 %v217, 0.125
    %v228 = vmul.f32 %v224, 0.125
    %v229 = vmul.f32 %v227, %v227
    %v230 = vsub.f32 %v228, %v229
    %v231 = vmax.f32 %v230, 0.0
    %v232 = vadd.f32 %v231, 1e-05
    %v233 = vrsqrt.pop %v232
    %v234 = vmul.f32 %v233, %v232
    %v235 = vmul.f32 %v234, %v233
    %v236 = vmul.f32 0.5, %v235
    %v237 = vsub.f32 1.5, %v236
    %v238 = vmul.f32 %v233, %v237
    %vm239 = vweird.f32 %v232
    %vm240 = vweird.f32 %v233
    %vm241 = vmor %vm239, %vm240
    %v242 = vsel %vm241, %v233, %v238
    %v243 = vmul.f32 %v225, %v242
    %v244 = vmul.f32 %v227, %v243
    %v245 = vsub.f32 %v226, %v244
    %v246 = vperm.slane %v243, 0
    %v247 = vmul.f32 %v209, %v246
    %v248 = vperm.slane %v245, 0
    %v249 = vadd.f32 %v247, %v248
    %v250 = vmul.f32 %v249, 0.01
    %v251 = vmax.f32 %v249, %v250
    %v252 = vpack.c.bf16 %v251, %v251
    %v253 = vld [vmem:[#allocation5 + $0x50] sm:$0xf]
    %v254 = vld [vmem:[#allocation5 + $0x54] sm:$0xf]
    %v255 = vld [vmem:[#allocation5 + $0x58] sm:$0xf]
    %v256 = vld [vmem:[#allocation5 + $0x5c] sm:$0xf]
    %v257 = vld [vmem:[#allocation5 + $0x60] sm:$0xf]
    %v258 = vld [vmem:[#allocation5 + $0x64] sm:$0xf]
    %v259 = vld [vmem:[#allocation5 + $0x68] sm:$0xf]
    %v260 = vld [vmem:[#allocation5 + $0x6c] sm:$0xf]
    %v261 = vld [vmem:[#allocation5 + $0x70] sm:$0xf]
    %v262 = vld [vmem:[#allocation5 + $0x74] sm:$0xf]
    %v263 = vld [vmem:[#allocation5 + $0x78] sm:$0xf]
    %v264 = vld [vmem:[#allocation5 + $0x7c] sm:$0xf]
    %v265 = vld [vmem:[#allocation5 + $0x80] sm:$0xf]
    %v266 = vld [vmem:[#allocation5 + $0x84] sm:$0xf]
    %v267 = vld [vmem:[#allocation5 + $0x88] sm:$0xf]
    %v268 = vld [vmem:[#allocation5 + $0x8c] sm:$0xf]
    %v269 = vld [vmem:[#allocation7 + $0x4] sm:$0x1]
    %v270 = vperm.slane %v269, 0
    %v287 = vunpack.c.l.b16 %v253
    %v288 = vunpack.c.l.b16 %v254
    %v289 = vunpack.c.l.b16 %v255
    %v290 = vunpack.c.l.b16 %v256
    %v291 = vunpack.c.l.b16 %v257
    %v292 = vunpack.c.l.b16 %v258
    %v293 = vunpack.c.l.b16 %v259
    %v294 = vunpack.c.l.b16 %v260
    %v295 = vunpack.c.l.b16 %v261
    %v296 = vunpack.c.l.b16 %v262
    %v297 = vunpack.c.l.b16 %v263
    %v298 = vunpack.c.l.b16 %v264
    %v299 = vunpack.c.l.b16 %v265
    %v300 = vunpack.c.l.b16 %v266
    %v301 = vunpack.c.l.b16 %v267
    %v302 = vunpack.c.l.b16 %v268
    %v303 = vpack.c.b16 %v288, %v287
    %v304 = vpack.c.b16 %v290, %v289
    %v305 = vpack.c.b16 %v292, %v291
    %v306 = vpack.c.b16 %v294, %v293
    %v307 = vpack.c.b16 %v296, %v295
    %v308 = vpack.c.b16 %v298, %v297
    %v309 = vpack.c.b16 %v300, %v299
    %v310 = vpack.c.b16 %v302, %v301
    %319 = vmatpush.bf16.msra.mxu0 %v310
    %320 = vmatpush.bf16.msra.mxu0 %v309
    %321 = vmatpush.bf16.msra.mxu0 %v308
    %322 = vmatpush.bf16.msra.mxu0 %v307
    %323 = vmatpush.bf16.msra.mxu0 %v306
    %324 = vmatpush.bf16.msra.mxu0 %v305
    %325 = vmatpush.bf16.msra.mxu0 %v304
    %326 = vmatpush.bf16.msra.mxu0 %v303
    %327 = vmatmul.bf16.gmra.mxu0 %v252
    %v328 = vpop.f32.mrf.mxu0
    %v329 = vadd.f32 %v270, %v328
    %v330 = vpop.f32.mrf.mxu0
    %331 = vdwg.mxu0
    %v332 = vtanh.pop %v329
    %333 = vst [vmem:[#allocation8] sm:$0xff] %v332
    // Predicated region
    $region26: #{tpu_custom_call.1} parent=1 // pred_check
      _
    $region27: #{tpu_custom_call.1} parent=1 // pred_check_branch
      %335 = sbr.rel (0) target = $region29
    $region28: #{tpu_custom_call.1} parent=1 // pred_region
      %337 = vsyncadd [#allocation4], 0
      %s339 = sshll.u32 [#allocation8], 4
      %s340 = int_to_ptr.vmem [resolvable:$true] %s339
      %s341 = sshll.u32 %s3, 4
      %s342 = int_to_ptr.hbm [resolvable:$true] %s341
      %344 = dma.vmem_to_hbm [thread:$0]  %s340, 128, %s342, [#allocation4]
    $region29: #{tpu_custom_call.1} parent=1 // pred_fallthru
      _
    // Predicated region
    $region30: #{tpu_custom_call.1} parent=1 // pred_check
      _
    $region31: #{tpu_custom_call.1} parent=1 // pred_check_branch
      %346 = sbr.rel (0) target = $region33
    $region32: #{tpu_custom_call.1} parent=1 // pred_region
      %348 = dma.done [#allocation4], 128
    $region33: #{tpu_custom_call.1} parent=1 // pred_fallthru
      _
    %349 = vsyncpa [#allocation3], 1
    %350 = vsyncpa [#allocation6], 1
    %351 = vsyncpa [#allocation4], 1

</llo_original>
